<compile_context>
chip_gen: v6e
topology: v6e:2x2x1
jax: 0.10.0
libtpu: 0.0.40
codegen_flags: <defaults>
</compile_context>

<pallas_src>
import functools

import jax
import jax.numpy as jnp
from jax import lax
from jax.experimental import pallas as pl
from jax.experimental.pallas import tpu as pltpu

LN_EPS = 1e-5
_VMEM_BUDGET = 24 * 1024 * 1024  # conservative per-step working set (v7x-safe)


def _round_up(x, m):
    return (x + m - 1) // m * m


def _head_kernel(x_ref, w_ref, b_ref, g_ref, beta_ref, o_ref, acc_ref,
                 *, e_valid, e_pad, mxu_dtype):
    k = pl.program_id(1)

    @pl.when(k == 0)
    def _():
        acc_ref[...] = jnp.zeros_like(acc_ref)

    lhs = x_ref[...]
    rhs = w_ref[...]
    if mxu_dtype is not None:
        lhs = lhs.astype(mxu_dtype)
        rhs = rhs.astype(mxu_dtype)
    acc_ref[...] += jnp.dot(lhs, rhs, preferred_element_type=jnp.float32)

    @pl.when(k == pl.num_programs(1) - 1)
    def _():
        # Bias + ReLU + LayerNorm epilogue, all in f32 on the accumulator.
        h = jnp.maximum(acc_ref[...] + b_ref[...], 0.0)          # (TB, E_pad)
        if e_valid != e_pad:
            # E was padded to a lane-dense width: keep LN statistics over the
            # real E lanes only (padded W/b columns are zero, so sum(h) is
            # already over valid lanes; the mask guards centered^2 and output).
            col = lax.broadcasted_iota(jnp.int32, h.shape, 1)
            mask = (col < e_valid).astype(jnp.float32)
            h = h * mask
            inv_e = 1.0 / float(e_valid)
            mean = jnp.sum(h, axis=-1, keepdims=True) * inv_e
            centered = (h - mean) * mask
            var = jnp.sum(centered * centered, axis=-1, keepdims=True) * inv_e
        else:
            mean = jnp.mean(h, axis=-1, keepdims=True)
            centered = h - mean
            var = jnp.mean(centered * centered, axis=-1, keepdims=True)
        normed = centered * lax.rsqrt(var + LN_EPS)               # EUP rsqrt
        o_ref[...] = (normed * g_ref[...] + beta_ref[...]).astype(o_ref.dtype)


def _choose_tiles(b_aligned, d, e_pad):
    """Pick (tile_b, tile_k) so the double-buffered working set fits ~24 MiB."""

    def ws_bytes(tb, tk):
        # 2x lhs block + 2x W block + 2x out block + accumulator + param rows.
        return 4 * (2 * tb * tk + 2 * tk * e_pad + 3 * tb * e_pad + 6 * e_pad)

    tile_k_opts = [d] if d <= 512 else [512, 256, 128]
    tile_b_opts = [t for t in (256, 128, 64, 32, 16, 8) if t <= b_aligned] or [8]

    for tb in tile_b_opts:          # prefer many LHS rows per MXU pass
        for tk in tile_k_opts:
            if ws_bytes(tb, tk) <= _VMEM_BUDGET:
                return tb, tk, ws_bytes(tb, tk)
    tb, tk = tile_b_opts[-1], tile_k_opts[-1]
    return tb, tk, ws_bytes(tb, tk)


def flexible_output_head(hidden_states, w, b, gamma, beta, *, mxu_dtype=None):
    """hidden_states: (B, S, D); w: (D, E); b/gamma/beta: (1, E) -> (B, E)."""
    B, S, D = hidden_states.shape
    Dw, E = w.shape
    assert Dw == D
    out_dtype = hidden_states.dtype

    # --- CLS pooling in the wrapper: only (B, D) ever gets DMA'd to the kernel.
    cls = hidden_states[:, 0, :]

    # --- Padding for lane/sublane density.
    e_pad = max(128, _round_up(E, 128))          # lane-dense output / LN row
    b_aligned = _round_up(B, 8)                  # f32 sublane alignment
    tile_b, tile_k, ws = _choose_tiles(b_aligned, D, e_pad)
    b_pad = _round_up(b_aligned, tile_b)
    d_pad = _round_up(D, tile_k)

    cls_p = jnp.pad(cls, ((0, b_pad - B), (0, d_pad - D)))
    w_p = jnp.pad(w, ((0, d_pad - D), (0, e_pad - E)))
    b_p = jnp.pad(b.reshape(1, E).astype(jnp.float32), ((0, 0), (0, e_pad - E)))
    g_p = jnp.pad(gamma.reshape(1, E).astype(jnp.float32), ((0, 0), (0, e_pad - E)))
    beta_p = jnp.pad(beta.reshape(1, E).astype(jnp.float32), ((0, 0), (0, e_pad - E)))

    if mxu_dtype is not None:
        # Halve HBM traffic for the matmul operands (v6e/v7x bf16 MXU); the
        # accumulator and the whole LN epilogue stay in f32.
        cls_p = cls_p.astype(mxu_dtype)
        w_p = w_p.astype(mxu_dtype)

    grid = (b_pad // tile_b, d_pad // tile_k)

    kernel = functools.partial(_head_kernel, e_valid=E, e_pad=e_pad,
                               mxu_dtype=mxu_dtype)

    out_p = pl.pallas_call(
        kernel,
        out_shape=jax.ShapeDtypeStruct((b_pad, e_pad), out_dtype),
        grid_spec=pltpu.PrefetchScalarGridSpec(
            num_scalar_prefetch=0,
            grid=grid,
            in_specs=[
                # CLS rows: (tile_b, tile_k) tile per (batch, K) grid step.
                pl.BlockSpec((tile_b, tile_k), lambda i, k: (i, k)),
                # W tile: index_map independent of the batch index, so the same
                # W block is reused (no re-fetch) across consecutive steps when
                # the K index doesn't change.
                pl.BlockSpec((tile_k, e_pad), lambda i, k: (k, 0)),
                pl.BlockSpec((1, e_pad), lambda i, k: (0, 0)),   # bias
                pl.BlockSpec((1, e_pad), lambda i, k: (0, 0)),   # gamma
                pl.BlockSpec((1, e_pad), lambda i, k: (0, 0)),   # beta
            ],
            out_specs=pl.BlockSpec((tile_b, e_pad), lambda i, k: (i, 0)),
            scratch_shapes=[pltpu.VMEM((tile_b, e_pad), jnp.float32)],
        ),
        compiler_params=pltpu.CompilerParams(
            dimension_semantics=("parallel", "arbitrary"),
            vmem_limit_bytes=int(min(max(2 * ws, 16 << 20), 48 << 20)),
        ),
    )(cls_p, w_p, b_p, g_p, beta_p)

    return out_p[:B, :E]


def _reference(hidden_states, w, b, gamma, beta):
    pooled = hidden_states[:, 0, :]
    h = jnp.maximum(pooled @ w + b, 0.0)
    mean = jnp.mean(h, axis=-1, keepdims=True)
    var = jnp.mean((h - mean) ** 2, axis=-1, keepdims=True)
    return (h - mean) / jnp.sqrt(var + LN_EPS) * gamma + beta


if __name__ == "__main__":
    B, S, D, E = 2, 8, 32, 32   # batch, seq, input_dim, embedding_dim

    key = jax.random.PRNGKey(0)
    k_x, k_w, k_b = jax.random.split(key, 3)

    hidden_states = jax.random.normal(k_x, (B, S, D), dtype=jnp.float32)

    # Deterministic parameter init (kaiming-uniform-ish bound like nn.Linear).
    bound = 1.0 / jnp.sqrt(D)
    w = jax.random.uniform(k_w, (D, E), minval=-bound, maxval=bound, dtype=jnp.float32)
    b = jax.random.uniform(k_b, (1, E), minval=-bound, maxval=bound, dtype=jnp.float32)
    gamma = jnp.ones((1, E), dtype=jnp.float32)   # LayerNorm weight
    beta = jnp.zeros((1, E), dtype=jnp.float32)   # LayerNorm bias

    ref = _reference(hidden_states, w, b, gamma, beta)

    # f32 path (matches the PyTorch module numerics).
    out = flexible_output_head(hidden_states, w, b, gamma, beta)
    out = jax.block_until_ready(out)
    assert out.shape == (B, E)
    assert jnp.allclose(out, ref, atol=1e-4, rtol=1e-4), "f32 mismatch vs reference"

    # bf16-MXU fast path (v6e/v7x): compare against a reference with
    # bf16-rounded matmul operands (f32 accumulation in both).
    out_bf16 = flexible_output_head(hidden_states, w, b, gamma, beta,
                                    mxu_dtype=jnp.bfloat16)
    out_bf16 = jax.block_until_ready(out_bf16)
    ref_bf16 = _reference(hidden_states.astype(jnp.bfloat16).astype(jnp.float32),
                          w.astype(jnp.bfloat16).astype(jnp.float32),
                          b, gamma, beta)
    assert jnp.allclose(out_bf16, ref_bf16, atol=1e-2, rtol=1e-2), \
        "bf16 mismatch vs reference"

    print("KERNEL_OK")
</pallas_src>

<mosaic_0001>
module attributes {stable_mosaic.version = 11 : i64} {
  func.func @_head_kernel(%arg0: i32, %arg1: i32, %arg2: memref<8x32xf32, #tpu.memory_space<vmem>>, %arg3: memref<32x128xf32, #tpu.memory_space<vmem>>, %arg4: memref<1x128xf32, #tpu.memory_space<vmem>>, %arg5: memref<1x128xf32, #tpu.memory_space<vmem>>, %arg6: memref<1x128xf32, #tpu.memory_space<vmem>>, %arg7: memref<8x128xf32, #tpu.memory_space<vmem>>, %arg8: memref<8x128xf32, #tpu.memory_space<vmem>>) attributes {dimension_semantics = [#tpu.dimension_semantics<parallel>, #tpu.dimension_semantics<arbitrary>], iteration_bounds = array<i64: 1, 1>, scalar_prefetch = 0 : i64, scratch_operands = 1 : i64, tpu.core_type = #tpu.core_type<tc>, window_params = [{transform_indices = @transform_0, window_bounds = array<i64: 8, 32>}, {transform_indices = @transform_1, window_bounds = array<i64: 32, 128>}, {pipeline_mode = #tpu.pipeline_mode<synchronous>, transform_indices = @transform_2, window_bounds = array<i64: 1, 128>}, {pipeline_mode = #tpu.pipeline_mode<synchronous>, transform_indices = @transform_3, window_bounds = array<i64: 1, 128>}, {pipeline_mode = #tpu.pipeline_mode<synchronous>, transform_indices = @transform_4, window_bounds = array<i64: 1, 128>}, {transform_indices = @transform_5, window_bounds = array<i64: 8, 128>}]} {
    %c0_i32 = arith.constant 0 : i32
    %0 = arith.cmpi eq, %arg1, %c0_i32 : i32
    %1 = arith.extui %0 : i1 to i32
    %c0_i32_0 = arith.constant 0 : i32
    %2 = arith.cmpi ne, %1, %c0_i32_0 : i32
    scf.if %2 {
      %cst_10 = arith.constant 0.000000e+00 : f32
      %12 = vector.broadcast %cst_10 : f32 to vector<8x128xf32>
      %c0_11 = arith.constant 0 : index
      %c0_12 = arith.constant 0 : index
      %13 = vector.load %arg8[%c0_11, %c0_12] : memref<8x128xf32, #tpu.memory_space<vmem>>, vector<8x128xf32>
      tpu.vector_store %arg8[%c0_11, %c0_12], %12 {strides = array<i32>} : memref<8x128xf32, #tpu.memory_space<vmem>>, vector<8x128xf32>,
    } else {
    }
    %c0 = arith.constant 0 : index
    %c0_1 = arith.constant 0 : index
    %3 = vector.load %arg2[%c0, %c0_1] : memref<8x32xf32, #tpu.memory_space<vmem>>, vector<8x32xf32>
    %c0_2 = arith.constant 0 : index
    %c0_3 = arith.constant 0 : index
    %4 = vector.load %arg3[%c0_2, %c0_3] : memref<32x128xf32, #tpu.memory_space<vmem>>, vector<32x128xf32>
    %c0_4 = arith.constant 0 : index
    %c0_5 = arith.constant 0 : index
    %5 = vector.load %arg8[%c0_4, %c0_5] : memref<8x128xf32, #tpu.memory_space<vmem>>, vector<8x128xf32>
    %cst = arith.constant dense<0.000000e+00> : vector<8x128xf32>
    %6 = tpu.matmul %3, %4, %cst {dimension_numbers = #tpu.dot_dimension_numbers<[1], [0], [0], [1], [0, 0, 1, 1], [], []>} : vector<8x32xf32>, vector<32x128xf32>, vector<8x128xf32> -> vector<8x128xf32>
    %7 = arith.addf %5, %6 : vector<8x128xf32>
    %c0_6 = arith.constant 0 : index
    %c0_7 = arith.constant 0 : index
    %8 = vector.load %arg8[%c0_6, %c0_7] : memref<8x128xf32, #tpu.memory_space<vmem>>, vector<8x128xf32>
    tpu.vector_store %arg8[%c0_6, %c0_7], %7 {strides = array<i32>} : memref<8x128xf32, #tpu.memory_space<vmem>>, vector<8x128xf32>,
    %c0_i32_8 = arith.constant 0 : i32
    %9 = arith.cmpi eq, %arg1, %c0_i32_8 : i32
    %10 = arith.extui %9 : i1 to i32
    %c0_i32_9 = arith.constant 0 : i32
    %11 = arith.cmpi ne, %10, %c0_i32_9 : i32
    scf.if %11 {
      %c0_10 = arith.constant 0 : index
      %c0_11 = arith.constant 0 : index
      %12 = vector.load %arg8[%c0_10, %c0_11] : memref<8x128xf32, #tpu.memory_space<vmem>>, vector<8x128xf32>
      %c0_12 = arith.constant 0 : index
      %c0_13 = arith.constant 0 : index
      %13 = vector.load %arg4[%c0_12, %c0_13] : memref<1x128xf32, #tpu.memory_space<vmem>>, vector<1x128xf32>
      %14 = vector.broadcast %13 : vector<1x128xf32> to vector<8x128xf32>
      %15 = arith.addf %12, %14 : vector<8x128xf32>
      %cst_14 = arith.constant 0.000000e+00 : f32
      %16 = vector.broadcast %cst_14 : f32 to vector<8x128xf32>
      %17 = arith.maximumf %15, %16 : vector<8x128xf32>
      %18 = tpu.iota {dimensions = array<i32: 1>} : vector<8x128xi32>
      %c32_i32 = arith.constant 32 : i32
      %19 = vector.broadcast %c32_i32 : i32 to vector<8x128xi32>
      %20 = arith.cmpi slt, %18, %19 : vector<8x128xi32>
      %21 = arith.extui %20 : vector<8x128xi1> to vector<8x128xi32>
      %22 = arith.sitofp %21 : vector<8x128xi32> to vector<8x128xf32>
      %23 = arith.mulf %17, %22 : vector<8x128xf32>
      %cst_15 = arith.constant dense<0.000000e+00> : vector<8xf32>
      %24 = vector.multi_reduction <add>, %23, %cst_15 [1] : vector<8x128xf32> to vector<8xf32>
      %25 = vector.shape_cast %24 : vector<8xf32> to vector<8x1xf32>
      %cst_16 = arith.constant 3.125000e-02 : f32
      %26 = vector.broadcast %cst_16 : f32 to vector<8x1xf32>
      %27 = arith.mulf %25, %26 : vector<8x1xf32>
      %28 = vector.broadcast %27 : vector<8x1xf32> to vector<8x128xf32>
      %29 = arith.subf %23, %28 : vector<8x128xf32>
      %30 = arith.mulf %29, %22 : vector<8x128xf32>
      %31 = arith.mulf %30, %30 : vector<8x128xf32>
      %cst_17 = arith.constant dense<0.000000e+00> : vector<8xf32>
      %32 = vector.multi_reduction <add>, %31, %cst_17 [1] : vector<8x128xf32> to vector<8xf32>
      %33 = vector.shape_cast %32 : vector<8xf32> to vector<8x1xf32>
      %cst_18 = arith.constant 3.125000e-02 : f32
      %34 = vector.broadcast %cst_18 : f32 to vector<8x1xf32>
      %35 = arith.mulf %33, %34 : vector<8x1xf32>
      %cst_19 = arith.constant 9.99999974E-6 : f32
      %36 = vector.broadcast %cst_19 : f32 to vector<8x1xf32>
      %37 = arith.addf %35, %36 : vector<8x1xf32>
      %38 = math.rsqrt %37 : vector<8x1xf32>
      %39 = vector.broadcast %38 : vector<8x1xf32> to vector<8x128xf32>
      %40 = arith.mulf %30, %39 : vector<8x128xf32>
      %c0_20 = arith.constant 0 : index
      %c0_21 = arith.constant 0 : index
      %41 = vector.load %arg5[%c0_20, %c0_21] : memref<1x128xf32, #tpu.memory_space<vmem>>, vector<1x128xf32>
      %42 = vector.broadcast %41 : vector<1x128xf32> to vector<8x128xf32>
      %43 = arith.mulf %40, %42 : vector<8x128xf32>
      %c0_22 = arith.constant 0 : index
      %c0_23 = arith.constant 0 : index
      %44 = vector.load %arg6[%c0_22, %c0_23] : memref<1x128xf32, #tpu.memory_space<vmem>>, vector<1x128xf32>
      %45 = vector.broadcast %44 : vector<1x128xf32> to vector<8x128xf32>
      %46 = arith.addf %43, %45 : vector<8x128xf32>
      %c0_24 = arith.constant 0 : index
      %c0_25 = arith.constant 0 : index
      %47 = vector.load %arg7[%c0_24, %c0_25] : memref<8x128xf32, #tpu.memory_space<vmem>>, vector<8x128xf32>
      tpu.vector_store %arg7[%c0_24, %c0_25], %46 {strides = array<i32>} : memref<8x128xf32, #tpu.memory_space<vmem>>, vector<8x128xf32>,
    } else {
    }
    return
  }
  func.func @transform_0(%arg0: i32, %arg1: i32) -> (i32, i32) {
    %c0_i32 = arith.constant 0 : i32
    return %arg0, %arg1 : i32, i32
  }
  func.func @transform_1(%arg0: i32, %arg1: i32) -> (i32, i32) {
    %c0_i32 = arith.constant 0 : i32
    %c0_i32_0 = arith.constant 0 : i32
    return %arg1, %c0_i32 : i32, i32
  }
  func.func @transform_2(%arg0: i32, %arg1: i32) -> (i32, i32) {
    %c0_i32 = arith.constant 0 : i32
    %c0_i32_0 = arith.constant 0 : i32
    %c0_i32_1 = arith.constant 0 : i32
    return %c0_i32, %c0_i32_0 : i32, i32
  }
  func.func @transform_3(%arg0: i32, %arg1: i32) -> (i32, i32) {
    %c0_i32 = arith.constant 0 : i32
    %c0_i32_0 = arith.constant 0 : i32
    %c0_i32_1 = arith.constant 0 : i32
    return %c0_i32, %c0_i32_0 : i32, i32
  }
  func.func @transform_4(%arg0: i32, %arg1: i32) -> (i32, i32) {
    %c0_i32 = arith.constant 0 : i32
    %c0_i32_0 = arith.constant 0 : i32
    %c0_i32_1 = arith.constant 0 : i32
    return %c0_i32, %c0_i32_0 : i32, i32
  }
  func.func @transform_5(%arg0: i32, %arg1: i32) -> (i32, i32) {
    %c0_i32 = arith.constant 0 : i32
    %c0_i32_0 = arith.constant 0 : i32
    return %arg0, %c0_i32 : i32, i32
  }
}

</mosaic_0001>

<llo_original>
// kernel: tpu_custom_call.1
$region0: #{tpu_custom_call.1}
  #allocation0 [shape = 'u32[]', space=smem, size = 0x4, offset = 0x4, fixed_abs, tag = 'smem constant byte address 0x4 - core index']
  #allocation1 [shape = 'u32[144,128]{1,0:T(1,128)}', space=vmem, size = 0x12000, scoped, tag = 'internal scratch']
  #allocation2 [shape = 'f32[8,128]{1,0:T(8,128)}', space=vmem, size = 0x1000, scoped, tag = 'scratch operand']
  %s0 = inlined_call_operand.hbm [shape: f32[8,32], index: 0, kind: input, shape index: {}]
  %s1 = inlined_call_operand.hbm [shape: f32[32,128], index: 1, kind: input, shape index: {}]
  %s2 = inlined_call_operand.vmem [shape: f32[1,128], index: 2, kind: input, shape index: {}]
  %s3 = inlined_call_operand.vmem [shape: f32[1,128], index: 3, kind: input, shape index: {}]
  %s4 = inlined_call_operand.vmem [shape: f32[1,128], index: 4, kind: input, shape index: {}]
  %s5 = inlined_call_operand.hbm [shape: f32[8,128], index: 5, kind: output, shape index: {}]
  %s6 = sld [smem:[#allocation0]]
  $region46: #{tpu_custom_call.1} parent=0
    _
  %s8 = ssub.s32 1, %s6
  %s9 = scalar_select 0, %s8, %s6
  $region1: #{tpu_custom_call.1} parent=0
    #allocation3 [shape = 'u8[4096]{0}', space=vmem, size = 0x1000, scoped, tag = 'input window, operand 0, single buffered']
    #allocation4 [shape = 's32[1]{0}', space=sflag, size = 0x4, scoped, tag = 'scoped memory for tpu_custom_call.1']
    #allocation5 [shape = 's32[1]{0}', space=sflag, size = 0x4, scoped, tag = 'scoped memory for tpu_custom_call.1']
    #allocation6 [shape = 'u8[16384]{0}', space=vmem, size = 0x4000, scoped, tag = 'input window, operand 1, single buffered']
    #allocation7 [shape = 's32[1]{0}', space=sflag, size = 0x4, scoped, tag = 'scoped memory for tpu_custom_call.1']
    #allocation8 [shape = 'u8[4096]{0}', space=vmem, size = 0x1000, scoped, tag = 'output window, operand 0, single buffered']
    %10 = vsyncpa [#allocation4], 0
    %11 = vsyncpa [#allocation7], 0
    %12 = vsyncpa [#allocation5], 0
    // Predicated region
    $region2: #{tpu_custom_call.1} parent=1 // pred_check
      _
    $region3: #{tpu_custom_call.1} parent=1 // pred_check_branch
      %14 = sbr.rel (0) target = $region5
    $region4: #{tpu_custom_call.1} parent=1 // pred_region
      %s16 = ssub.s32 128, 128
      %17 = vsyncadd [#allocation4], %s16
      %s19 = sshll.u32 [#allocation3], 4
      %s20 = int_to_ptr.vmem [resolvable:$true] %s19
      %22 = dma.hbm_to_vmem [thread:$0]  %s0, 128, %s20, [#allocation4]
    $region5: #{tpu_custom_call.1} parent=1 // pred_fallthru
      _
    // Predicated region
    $region6: #{tpu_custom_call.1} parent=1 // pred_check
      _
    $region7: #{tpu_custom_call.1} parent=1 // pred_check_branch
      %24 = sbr.rel (0) target = $region9
    $region8: #{tpu_custom_call.1} parent=1 // pred_region
      %s26 = ssub.s32 512, 512
      %27 = vsyncadd [#allocation7], %s26
      %s28 = sshll.u32 [#allocation6], 4
      %s29 = int_to_ptr.vmem [resolvable:$true] %s28
      %34 = dma.hbm_to_vmem [thread:$0]  %s1, 512, %s29, [#allocation7], 128, 128, 8
    $region9: #{tpu_custom_call.1} parent=1 // pred_fallthru
      _
    // Predicated region
    $region10: #{tpu_custom_call.1} parent=1 // pred_check
      _
    $region11: #{tpu_custom_call.1} parent=1 // pred_check_branch
      %36 = sbr.rel (0) target = $region13
    $region12: #{tpu_custom_call.1} parent=1 // pred_region
      _
    $region13: #{tpu_custom_call.1} parent=1 // pred_fallthru
      _
    // Predicated region
    $region14: #{tpu_custom_call.1} parent=1 // pred_check
      _
    $region15: #{tpu_custom_call.1} parent=1 // pred_check_branch
      %38 = sbr.rel (0) target = $region17
    $region16: #{tpu_custom_call.1} parent=1 // pred_region
      _
    $region17: #{tpu_custom_call.1} parent=1 // pred_fallthru
      _
    // Predicated region
    $region18: #{tpu_custom_call.1} parent=1 // pred_check
      _
    $region19: #{tpu_custom_call.1} parent=1 // pred_check_branch
      %40 = sbr.rel (0) target = $region21
    $region20: #{tpu_custom_call.1} parent=1 // pred_region
      _
    $region21: #{tpu_custom_call.1} parent=1 // pred_fallthru
      _
    // Predicated region
    $region22: #{tpu_custom_call.1} parent=1 // pred_check
      _
    $region23: #{tpu_custom_call.1} parent=1 // pred_check_branch
      %42 = sbr.rel (0) target = $region25
    $region24: #{tpu_custom_call.1} parent=1 // pred_region
      %43 = dma.done [#allocation4], 128
    $region25: #{tpu_custom_call.1} parent=1 // pred_fallthru
      _
    // Predicated region
    $region26: #{tpu_custom_call.1} parent=1 // pred_check
      _
    $region27: #{tpu_custom_call.1} parent=1 // pred_check_branch
      %45 = sbr.rel (0) target = $region29
    $region28: #{tpu_custom_call.1} parent=1 // pred_region
      %46 = dma.done [#allocation7], 512
    $region29: #{tpu_custom_call.1} parent=1 // pred_fallthru
      _
    %p47 = scmp.eq.s32.totalorder 0, 0
    // Predicated region
    $region30: #{tpu_custom_call.1} parent=1 // pred_check
      %p48 = pneg %p47
    $region31: #{tpu_custom_call.1} parent=1 // pred_check_branch
      %50 = sbr.rel (%p48) target = $region33
    $region32: #{tpu_custom_call.1} parent=1 // pred_region
      %51 = vst [vmem:[#allocation2] sm:$0xff] 0.0
    $region33: #{tpu_custom_call.1} parent=1 // pred_fallthru
      _
    %v52 = vld [vmem:[#allocation3] sm:$0xff]
    %v53 = vld [vmem:[#allocation6] sm:$0xff]
    %v54 = vld [vmem:[#allocation6 + $0x8] sm:$0xff]
    %v55 = vld [vmem:[#allocation6 + $0x10] sm:$0xff]
    %v56 = vld [vmem:[#allocation6 + $0x18] sm:$0xff]
    %v57 = vld [vmem:[#allocation2] sm:$0xff]
    %vm58 = vcmask 261120
    %v60 = vsel %vm58, %v52, 0
    %62 = vmatprep.subr.mxu0 0.0
    %63 = vmatpush1.msra.mxu0 0.0
    %64 = vmatprep.subr.mxu0 0.0
    %65 = vmatpush1.msra.mxu0 0.0
    %66 = vmatprep.subr.mxu0 0.0
    %67 = vmatpush1.msra.mxu0 0.0
    %68 = vmatprep.subr.mxu0 0.0
    %69 = vmatpush1.msra.mxu0 0.0
    %70 = vmatprep.subr.mxu0 0.0
    %71 = vmatpush1.msra.mxu0 0.0
    %72 = vmatprep.subr.mxu0 0.0
    %73 = vmatpush1.msra.mxu0 0.0
    %74 = vmatprep.subr.mxu0 0.0
    %75 = vmatpush1.msra.mxu0 0.0
    %76 = vmatprep.subr.mxu0 0.0
    %77 = vmatpush1.msra.mxu0 0.0
    %78 = vmatprep.subr.mxu0 0.0
    %79 = vmatpush1.msra.mxu0 0.0
    %80 = vmatprep.subr.mxu0 0.0
    %81 = vmatpush1.msra.mxu0 0.0
    %82 = vmatprep.subr.mxu0 0.0
    %83 = vmatpush1.msra.mxu0 0.0
    %84 = vmatprep.subr.mxu0 0.0
    %85 = vmatpush1.msra.mxu0 0.0
    %86 = vmatprep.subr.mxu0 0.0
    %87 = vmatpush1.msra.mxu0 %v56
    %88 = vmatprep.subr.mxu0 0.0
    %89 = vmatpush1.msra.mxu0 %v55
    %90 = vmatprep.subr.mxu0 0.0
    %91 = vmatpush1.msra.mxu0 %v54
    %92 = vmatprep.subr.mxu0 0.0
    %93 = vmatpush1.msra.mxu0 %v53
    %94 = vmatprep.subr.mxu0 0.0
    %95 = vmatpush2.msra.mxu0 0.0
    %96 = vmatprep.subr.mxu0 0.0
    %97 = vmatpush2.msra.mxu0 0.0
    %98 = vmatprep.subr.mxu0 0.0
    %99 = vmatpush2.msra.mxu0 0.0
    %100 = vmatprep.subr.mxu0 0.0
    %101 = vmatpush2.msra.mxu0 0.0
    %102 = vmatprep.subr.mxu0 0.0
    %103 = vmatpush2.msra.mxu0 0.0
    %104 = vmatprep.subr.mxu0 0.0
    %105 = vmatpush2.msra.mxu0 0.0
    %106 = vmatprep.subr.mxu0 0.0
    %107 = vmatpush2.msra.mxu0 0.0
    %108 = vmatprep.subr.mxu0 0.0
    %109 = vmatpush2.msra.mxu0 0.0
    %110 = vmatprep.subr.mxu0 0.0
    %111 = vmatpush2.msra.mxu0 0.0
    %112 = vmatprep.subr.mxu0 0.0
    %113 = vmatpush2.msra.mxu0 0.0
    %114 = vmatprep.subr.mxu0 0.0
    %115 = vmatpush2.msra.mxu0 0.0
    %116 = vmatprep.subr.mxu0 0.0
    %117 = vmatpush2.msra.mxu0 0.0
    %118 = vmatprep.subr.mxu0 0.0
    %119 = vmatpush2.msra.mxu0 0.0
    %120 = vmatprep.subr.mxu0 0.0
    %121 = vmatpush2.msra.mxu0 0.0
    %122 = vmatprep.subr.mxu0 0.0
    %123 = vmatpush2.msra.mxu0 0.0
    %124 = vmatprep.subr.mxu0 0.0
    %125 = vmatpush2.msra.mxu0 0.0
    %126 = vmatprep.mubr.f32.mxu0 0.0
    %127 = vmatmul.mubr.f32.gmra.mxu0 %v60
    %v128 = vpop.f32.mrf.mxu0
    %v129 = vadd.f32 0.0, %v128
    %v130 = vpop.f32.mrf.mxu0
    %131 = vdwg.mxu0
    %v132 = vadd.f32 %v57, %v129
    %133 = vst [vmem:[#allocation2] sm:$0xff] %v132
    // Predicated region
    $region34: #{tpu_custom_call.1} parent=1 // pred_check
      %p134 = pneg %p47
    $region35: #{tpu_custom_call.1} parent=1 // pred_check_branch
      %136 = sbr.rel (%p134) target = $region37
    $region36: #{tpu_custom_call.1} parent=1 // pred_region
      %v137 = vld [vmem:[#allocation2] sm:$0xff]
      %v138 = vld [vmem:[%s2] sm:$0x1]
      %v140 = vlaneseq
      %v141 = vshrl.u32 %v140, 7
      %v142 = vsub.s32 0, %v141
      %v143 = vrot.slane %v138, %v142
      %v145 = vadd.f32 %v137, %v143
      %v146 = vmax.f32 %v145, 0.0
      %v147 = vlaneseq
      %v148 = vand.u32 %v147, 127
      %vm149 = vcmp.lt.s32.totalorder %v148, 32
      %v150 = vsel %vm149, 1, 0
      %v151 = vcvt.s32.f32 %v150
      %v152 = vmul.f32 %v146, %v151
      %153 = vadd.xlane.f32.xlu0 %v152
      %v154 = vpop.xlane.xlu0 %153
      %v155 = vmul.f32 %v154, 0.03125
      %v156 = vsub.f32 %v152, %v155
      %v157 = vmul.f32 %v156, %v151
      %v158 = vmul.f32 %v157, %v157
      %159 = vadd.xlane.f32.xlu0 %v158
      %v160 = vpop.xlane.xlu0 %159
      %v161 = vmul.f32 %v160, 0.03125
      %v162 = vadd.f32 %v161, 1e-05
      %v163 = vrsqrt.pop %v162
      %v164 = vmul.f32 %v157, %v163
      %v165 = vld [vmem:[%s3] sm:$0x1]
      %v167 = vlaneseq
      %v168 = vshrl.u32 %v167, 7
      %v169 = vsub.s32 0, %v168
      %v170 = vrot.slane %v165, %v169
      %v172 = vmul.f32 %v164, %v170
      %v173 = vld [vmem:[%s4] sm:$0x1]
      %v175 = vlaneseq
      %v176 = vshrl.u32 %v175, 7
      %v177 = vsub.s32 0, %v176
      %v178 = vrot.slane %v173, %v177
      %v180 = vadd.f32 %v172, %v178
      %181 = vst [vmem:[#allocation8] sm:$0xff] %v180
    $region37: #{tpu_custom_call.1} parent=1 // pred_fallthru
      _
    // Predicated region
    $region38: #{tpu_custom_call.1} parent=1 // pred_check
      _
    $region39: #{tpu_custom_call.1} parent=1 // pred_check_branch
      %183 = sbr.rel (0) target = $region41
    $region40: #{tpu_custom_call.1} parent=1 // pred_region
      %s185 = ssub.s32 128, 128
      %186 = vsyncadd [#allocation5], %s185
      %s188 = sshll.u32 [#allocation8], 4
      %s189 = int_to_ptr.vmem [resolvable:$true] %s188
      %191 = dma.vmem_to_hbm [thread:$0]  %s189, 128, %s5, [#allocation5]
    $region41: #{tpu_custom_call.1} parent=1 // pred_fallthru
      _
    // Predicated region
    $region42: #{tpu_custom_call.1} parent=1 // pred_check
      _
    $region43: #{tpu_custom_call.1} parent=1 // pred_check_branch
      %193 = sbr.rel (0) target = $region45
    $region44: #{tpu_custom_call.1} parent=1 // pred_region
      %194 = dma.done [#allocation5], 128
    $region45: #{tpu_custom_call.1} parent=1 // pred_fallthru
      _
    %195 = vsyncpa [#allocation4], 1
    %196 = vsyncpa [#allocation7], 1
    %197 = vsyncpa [#allocation5], 1

</llo_original>
